<compile_context>
chip_gen: v5e
topology: v5e:2x2
jax: 0.10.0
libtpu: 0.0.40
codegen_flags: <defaults>
</compile_context>

<pallas_src>
import functools
import math

import jax
import jax.numpy as jnp
from jax.experimental import pallas as pl
from jax.experimental.pallas import tpu as pltpu

EPS = 1e-5  # nn.InstanceNorm2d default eps (affine=False, biased variance)


def _reflect_taps(x, masks, W):
    """The 9 reflection-padded 3x3 neighbourhood slabs, ordered k = kh*3 + kw.

    x: (B, C, HW) f32, row-major flattened spatial.  Rolls along the last axis
    act per (b, c) row, so there is no cross-sample / cross-channel bleed; the
    wrap-around values at image boundaries are replaced by the reflected
    neighbour via the precomputed masks.
    """
    h_first, h_last, w_first, w_last = masks
    up = jnp.roll(x, -W, axis=-1)             # x[h+1, w]  (wrap at h=H-1 masked)
    dn = jnp.roll(x, W, axis=-1)              # x[h-1, w]  (wrap at h=0   masked)
    rows = (
        jnp.where(h_first, up, dn),           # dh = -1 : x[reflect(h-1), w]
        x,                                    # dh =  0
        jnp.where(h_last, dn, up),            # dh = +1 : x[reflect(h+1), w]
    )
    taps = []
    for xh in rows:
        lt = jnp.roll(xh, -1, axis=-1)        # xh[h, w+1] (wrap masked)
        rt = jnp.roll(xh, 1, axis=-1)         # xh[h, w-1] (wrap masked)
        taps.append(jnp.where(w_first, lt, rt))   # dw = -1 : xh[h, reflect(w-1)]
        taps.append(xh)                           # dw =  0
        taps.append(jnp.where(w_last, rt, lt))    # dw = +1 : xh[h, reflect(w+1)]
    return taps


def _conv3x3_instnorm(x, w_cat, masks, W, mxu_dtype):
    """ReflectionPad2d(1) + Conv2d(3x3, no bias) + InstanceNorm2d on a (B, C, HW) slab.

    The 9 shifted slabs are concatenated along the contraction axis and the
    conv becomes ONE (C_out, 9*C_in) @ (9*C_in, HW) MXU matmul per sample
    (K = 9*C_in streams the systolic array far better than 9 tiny K=C_in dots
    plus 8 full-slab VPU accumulation adds).  The conv bias is intentionally
    omitted: a per-channel constant only shifts the mean and is exactly
    cancelled by InstanceNorm(affine=False).
    """
    B, C, HW = x.shape
    taps = _reflect_taps(x, masks, W)
    slab = jnp.concatenate(taps, axis=1).astype(mxu_dtype)     # (B, 9C, HW)
    wm = w_cat.astype(mxu_dtype)                               # (C, 9C)
    y = jnp.stack(
        [jnp.dot(wm, slab[b], preferred_element_type=jnp.float32)
         for b in range(B)],
        axis=0)                                                # (B, C, HW) f32
    # InstanceNorm statistics: f32, biased variance, centered (robust) form.
    inv_n = 1.0 / float(HW)
    mean = jnp.sum(y, axis=-1, keepdims=True) * inv_n
    yc = y - mean
    var = jnp.sum(yc * yc, axis=-1, keepdims=True) * inv_n
    return yc * jax.lax.rsqrt(var + EPS)


def _resblock_kernel(x_ref, row_ref, col_ref, w1_ref, w2_ref, o_ref, *,
                     H, W, mxu_dtype):
    # x_ref / o_ref: (B, C, HW) blocks — B samples per grid step, lane-dense HW.
    # Boundary masks for the in-register ReflectionPad2d(1) are derived ONCE per
    # grid step from VMEM-resident integer index maps and reused by both stages.
    row = row_ref[...]                      # (1, 1, HW) int32
    col = col_ref[...]
    masks = (row == 0, row == H - 1, col == 0, col == W - 1)

    x = x_ref[...].astype(jnp.float32)
    y1 = jnp.maximum(_conv3x3_instnorm(x, w1_ref[...], masks, W, mxu_dtype), 0.0)
    y2 = _conv3x3_instnorm(y1, w2_ref[...], masks, W, mxu_dtype)
    o_ref[...] = (x + y2).astype(o_ref.dtype)   # single unmasked full-block store


def _pick_samples_per_step(n, c, hw, budget_bytes=48 << 20):
    """Largest divisor of n that fits the VMEM budget while keeping >= 2 grid
    steps when possible (so v7x's two TensorCores both get work on the
    "parallel" batch axis; on single-TC v5e/v6e the extra steps cost nothing)."""
    per_sample = 16 * c * hw * 4        # x + im2col slab + temps + I/O buffers, f32
    max_b = max(1, budget_bytes // per_sample)
    best = 1
    for b in range(1, n + 1):
        if n % b == 0 and b <= max_b and (n // b >= 2 or n == 1):
            best = b
    return best


def residual_block_forward(x, w1, b1, w2, b2, *, mxu_dtype=jnp.float32):
    """x + IN(conv2(pad(ReLU(IN(conv1(pad(x)))))))  — matches ResidualBlock.forward.

    b1/b2 are accepted for interface parity with the PyTorch module but unused:
    InstanceNorm2d(affine=False) cancels a per-channel conv bias exactly.
    On v6e/v7x, mxu_dtype=jnp.bfloat16 halves MXU cycles / slab VMEM when ~1e-3
    accuracy is acceptable (IN statistics stay f32 either way; keep f32 on v5e's
    elementwise path regardless).
    """
    del b1, b2
    N, C, H, W = x.shape
    assert H >= 2 and W >= 2, "ReflectionPad2d(1) requires H, W >= 2"
    HW = H * W
    B = _pick_samples_per_step(N, C, HW)
    G = N // B

    def prep_w(w):   # OIHW (C,C,3,3) -> (C_out, 9*C_in); column index = k*C_in + c_in
        return jnp.transpose(w, (0, 2, 3, 1)).reshape(C, 9 * C).astype(jnp.float32)

    # Integer spatial index maps, built once in the wrapper (VMEM-resident,
    # re-fetch skipped since their block index never changes).
    row_idx = jnp.repeat(jnp.arange(H, dtype=jnp.int32), W).reshape(1, 1, HW)
    col_idx = jnp.tile(jnp.arange(W, dtype=jnp.int32), H).reshape(1, 1, HW)

    # Explicit scoped-VMEM limit sized from the fused live set (the defaults —
    # 16 MiB on v5e, 32 MiB on v6e/v7x — are hit long before physical VMEM).
    act = B * C * HW * 4
    est = 16 * act + 2 * (9 * C * C * 4) + 2 * HW * 4
    vmem_limit = int(min(max(2 * est, 8 << 20), 64 << 20))
    # TODO(synk): row-block spatial tiling + two-pass InstanceNorm fallback for
    # feature maps whose fused live set exceeds VMEM (e.g. C=128 @ 256x256 on v7x).

    kernel = functools.partial(_resblock_kernel, H=H, W=W, mxu_dtype=mxu_dtype)
    out = pl.pallas_call(
        kernel,
        out_shape=jax.ShapeDtypeStruct((N, C, HW), x.dtype),
        grid=(G,),
        in_specs=[
            pl.BlockSpec((B, C, HW), lambda g: (g, 0, 0)),   # activations (lane-dense)
            pl.BlockSpec((1, 1, HW), lambda g: (0, 0, 0)),   # row index map
            pl.BlockSpec((1, 1, HW), lambda g: (0, 0, 0)),   # col index map
            pl.BlockSpec((C, 9 * C), lambda g: (0, 0)),      # conv1 weights (im2col layout)
            pl.BlockSpec((C, 9 * C), lambda g: (0, 0)),      # conv2 weights
        ],
        out_specs=pl.BlockSpec((B, C, HW), lambda g: (g, 0, 0)),
        compiler_params=pltpu.CompilerParams(
            dimension_semantics=("parallel",),
            vmem_limit_bytes=vmem_limit,
        ),
    )(x.reshape(N, C, HW), row_idx, col_idx, prep_w(w1), prep_w(w2))
    return out.reshape(N, C, H, W)


def _reference(x, w1, b1, w2, b2):
    """Pure-JAX reference of the PyTorch module (with conv biases) for validation."""
    def conv(xin, w, b):
        xp = jnp.pad(xin, ((0, 0), (0, 0), (1, 1), (1, 1)), mode="reflect")
        y = jax.lax.conv_general_dilated(
            xp, w, window_strides=(1, 1), padding="VALID",
            dimension_numbers=("NCHW", "OIHW", "NCHW"))
        return y + b[None, :, None, None]

    def inorm(y):
        m = jnp.mean(y, axis=(2, 3), keepdims=True)
        v = jnp.mean((y - m) ** 2, axis=(2, 3), keepdims=True)
        return (y - m) * jax.lax.rsqrt(v + EPS)

    h = jax.nn.relu(inorm(conv(x, w1, b1)))
    return x + inorm(conv(h, w2, b2))


if __name__ == "__main__":
    key = jax.random.PRNGKey(0)
    kx, kw1, kb1, kw2, kb2 = jax.random.split(key, 5)

    N, C, H, W = 2, 4, 16, 16                      # in_features = 4
    x = jax.random.normal(kx, (N, C, H, W), jnp.float32)

    # Deterministic parameter init (PyTorch Conv2d default uniform bound).
    bound = 1.0 / math.sqrt(C * 3 * 3)
    w1 = jax.random.uniform(kw1, (C, C, 3, 3), jnp.float32, -bound, bound)
    b1 = jax.random.uniform(kb1, (C,), jnp.float32, -bound, bound)
    w2 = jax.random.uniform(kw2, (C, C, 3, 3), jnp.float32, -bound, bound)
    b2 = jax.random.uniform(kb2, (C,), jnp.float32, -bound, bound)

    out = jax.jit(residual_block_forward)(x, w1, b1, w2, b2)
    out = jax.block_until_ready(out)

    ref = _reference(x, w1, b1, w2, b2)
    assert out.shape == ref.shape and out.dtype == ref.dtype
    max_err = float(jnp.max(jnp.abs(out - ref)))
    assert jnp.allclose(out, ref, atol=1e-4, rtol=1e-4), f"max_err={max_err}"
    print("KERNEL_OK")
</pallas_src>

<mosaic_0001>
module attributes {stable_mosaic.version = 11 : i64} {
  func.func @_resblock_kernel(%arg0: i32, %arg1: memref<1x4x256xf32, #tpu.memory_space<vmem>>, %arg2: memref<1x1x256xi32, #tpu.memory_space<vmem>>, %arg3: memref<1x1x256xi32, #tpu.memory_space<vmem>>, %arg4: memref<4x36xf32, #tpu.memory_space<vmem>>, %arg5: memref<4x36xf32, #tpu.memory_space<vmem>>, %arg6: memref<1x4x256xf32, #tpu.memory_space<vmem>>) attributes {dimension_semantics = [#tpu.dimension_semantics<parallel>], iteration_bounds = array<i64: 2>, scalar_prefetch = 0 : i64, scratch_operands = 0 : i64, tpu.core_type = #tpu.core_type<tc>, window_params = [{transform_indices = @transform_0, window_bounds = array<i64: 1, 4, 256>}, {pipeline_mode = #tpu.pipeline_mode<synchronous>, transform_indices = @transform_1, window_bounds = array<i64: 1, 1, 256>}, {pipeline_mode = #tpu.pipeline_mode<synchronous>, transform_indices = @transform_2, window_bounds = array<i64: 1, 1, 256>}, {pipeline_mode = #tpu.pipeline_mode<synchronous>, transform_indices = @transform_3, window_bounds = array<i64: 4, 36>}, {pipeline_mode = #tpu.pipeline_mode<synchronous>, transform_indices = @transform_4, window_bounds = array<i64: 4, 36>}, {transform_indices = @transform_5, window_bounds = array<i64: 1, 4, 256>}]} {
    %c0 = arith.constant 0 : index
    %c0_0 = arith.constant 0 : index
    %c0_1 = arith.constant 0 : index
    %0 = vector.load %arg2[%c0, %c0_0, %c0_1] : memref<1x1x256xi32, #tpu.memory_space<vmem>>, vector<1x1x256xi32>
    %c0_2 = arith.constant 0 : index
    %c0_3 = arith.constant 0 : index
    %c0_4 = arith.constant 0 : index
    %1 = vector.load %arg3[%c0_2, %c0_3, %c0_4] : memref<1x1x256xi32, #tpu.memory_space<vmem>>, vector<1x1x256xi32>
    %c0_i32 = arith.constant 0 : i32
    %2 = vector.broadcast %c0_i32 : i32 to vector<1x1x256xi32>
    %3 = arith.cmpi eq, %0, %2 : vector<1x1x256xi32>
    %c15_i32 = arith.constant 15 : i32
    %4 = vector.broadcast %c15_i32 : i32 to vector<1x1x256xi32>
    %5 = arith.cmpi eq, %0, %4 : vector<1x1x256xi32>
    %c0_i32_5 = arith.constant 0 : i32
    %6 = vector.broadcast %c0_i32_5 : i32 to vector<1x1x256xi32>
    %7 = arith.cmpi eq, %1, %6 : vector<1x1x256xi32>
    %c15_i32_6 = arith.constant 15 : i32
    %8 = vector.broadcast %c15_i32_6 : i32 to vector<1x1x256xi32>
    %9 = arith.cmpi eq, %1, %8 : vector<1x1x256xi32>
    %c0_7 = arith.constant 0 : index
    %c0_8 = arith.constant 0 : index
    %c0_9 = arith.constant 0 : index
    %10 = vector.load %arg1[%c0_7, %c0_8, %c0_9] : memref<1x4x256xf32, #tpu.memory_space<vmem>>, vector<1x4x256xf32>
    %c0_10 = arith.constant 0 : index
    %c0_11 = arith.constant 0 : index
    %11 = vector.load %arg4[%c0_10, %c0_11] : memref<4x36xf32, #tpu.memory_space<vmem>>, vector<4x36xf32>
    %12 = vector.extract_strided_slice %10 {offsets = [0, 0, 16], sizes = [1, 4, 240], strides = [1, 1, 1]} : vector<1x4x256xf32> to vector<1x4x240xf32>
    %13 = vector.extract_strided_slice %10 {offsets = [0, 0, 0], sizes = [1, 4, 16], strides = [1, 1, 1]} : vector<1x4x256xf32> to vector<1x4x16xf32>
    %14 = tpu.concatenate %12, %13 in 2 : vector<1x4x240xf32>, vector<1x4x16xf32> -> vector<1x4x256xf32>
    %15 = vector.extract_strided_slice %10 {offsets = [0, 0, 240], sizes = [1, 4, 16], strides = [1, 1, 1]} : vector<1x4x256xf32> to vector<1x4x16xf32>
    %16 = vector.extract_strided_slice %10 {offsets = [0, 0, 0], sizes = [1, 4, 240], strides = [1, 1, 1]} : vector<1x4x256xf32> to vector<1x4x240xf32>
    %17 = tpu.concatenate %15, %16 in 2 : vector<1x4x16xf32>, vector<1x4x240xf32> -> vector<1x4x256xf32>
    %18 = vector.shape_cast %3 : vector<1x1x256xi1> to vector<1x1x256xi1>
    %19 = vector.broadcast %18 : vector<1x1x256xi1> to vector<1x4x256xi1>
    %20 = arith.select %19, %14, %17 : vector<1x4x256xi1>, vector<1x4x256xf32>
    %21 = vector.shape_cast %5 : vector<1x1x256xi1> to vector<1x1x256xi1>
    %22 = vector.broadcast %21 : vector<1x1x256xi1> to vector<1x4x256xi1>
    %23 = arith.select %22, %17, %14 : vector<1x4x256xi1>, vector<1x4x256xf32>
    %24 = vector.extract_strided_slice %20 {offsets = [0, 0, 1], sizes = [1, 4, 255], strides = [1, 1, 1]} : vector<1x4x256xf32> to vector<1x4x255xf32>
    %25 = vector.extract_strided_slice %20 {offsets = [0, 0, 0], sizes = [1, 4, 1], strides = [1, 1, 1]} : vector<1x4x256xf32> to vector<1x4x1xf32>
    %26 = tpu.concatenate %24, %25 in 2 : vector<1x4x255xf32>, vector<1x4x1xf32> -> vector<1x4x256xf32>
    %27 = vector.extract_strided_slice %20 {offsets = [0, 0, 255], sizes = [1, 4, 1], strides = [1, 1, 1]} : vector<1x4x256xf32> to vector<1x4x1xf32>
    %28 = vector.extract_strided_slice %20 {offsets = [0, 0, 0], sizes = [1, 4, 255], strides = [1, 1, 1]} : vector<1x4x256xf32> to vector<1x4x255xf32>
    %29 = tpu.concatenate %27, %28 in 2 : vector<1x4x1xf32>, vector<1x4x255xf32> -> vector<1x4x256xf32>
    %30 = vector.shape_cast %7 : vector<1x1x256xi1> to vector<1x1x256xi1>
    %31 = vector.broadcast %30 : vector<1x1x256xi1> to vector<1x4x256xi1>
    %32 = arith.select %31, %26, %29 : vector<1x4x256xi1>, vector<1x4x256xf32>
    %33 = vector.shape_cast %9 : vector<1x1x256xi1> to vector<1x1x256xi1>
    %34 = vector.broadcast %33 : vector<1x1x256xi1> to vector<1x4x256xi1>
    %35 = arith.select %34, %29, %26 : vector<1x4x256xi1>, vector<1x4x256xf32>
    %36 = vector.extract_strided_slice %10 {offsets = [0, 0, 1], sizes = [1, 4, 255], strides = [1, 1, 1]} : vector<1x4x256xf32> to vector<1x4x255xf32>
    %37 = vector.extract_strided_slice %10 {offsets = [0, 0, 0], sizes = [1, 4, 1], strides = [1, 1, 1]} : vector<1x4x256xf32> to vector<1x4x1xf32>
    %38 = tpu.concatenate %36, %37 in 2 : vector<1x4x255xf32>, vector<1x4x1xf32> -> vector<1x4x256xf32>
    %39 = vector.extract_strided_slice %10 {offsets = [0, 0, 255], sizes = [1, 4, 1], strides = [1, 1, 1]} : vector<1x4x256xf32> to vector<1x4x1xf32>
    %40 = vector.extract_strided_slice %10 {offsets = [0, 0, 0], sizes = [1, 4, 255], strides = [1, 1, 1]} : vector<1x4x256xf32> to vector<1x4x255xf32>
    %41 = tpu.concatenate %39, %40 in 2 : vector<1x4x1xf32>, vector<1x4x255xf32> -> vector<1x4x256xf32>
    %42 = vector.shape_cast %7 : vector<1x1x256xi1> to vector<1x1x256xi1>
    %43 = vector.broadcast %42 : vector<1x1x256xi1> to vector<1x4x256xi1>
    %44 = arith.select %43, %38, %41 : vector<1x4x256xi1>, vector<1x4x256xf32>
    %45 = vector.shape_cast %9 : vector<1x1x256xi1> to vector<1x1x256xi1>
    %46 = vector.broadcast %45 : vector<1x1x256xi1> to vector<1x4x256xi1>
    %47 = arith.select %46, %41, %38 : vector<1x4x256xi1>, vector<1x4x256xf32>
    %48 = vector.extract_strided_slice %23 {offsets = [0, 0, 1], sizes = [1, 4, 255], strides = [1, 1, 1]} : vector<1x4x256xf32> to vector<1x4x255xf32>
    %49 = vector.extract_strided_slice %23 {offsets = [0, 0, 0], sizes = [1, 4, 1], strides = [1, 1, 1]} : vector<1x4x256xf32> to vector<1x4x1xf32>
    %50 = tpu.concatenate %48, %49 in 2 : vector<1x4x255xf32>, vector<1x4x1xf32> -> vector<1x4x256xf32>
    %51 = vector.extract_strided_slice %23 {offsets = [0, 0, 255], sizes = [1, 4, 1], strides = [1, 1, 1]} : vector<1x4x256xf32> to vector<1x4x1xf32>
    %52 = vector.extract_strided_slice %23 {offsets = [0, 0, 0], sizes = [1, 4, 255], strides = [1, 1, 1]} : vector<1x4x256xf32> to vector<1x4x255xf32>
    %53 = tpu.concatenate %51, %52 in 2 : vector<1x4x1xf32>, vector<1x4x255xf32> -> vector<1x4x256xf32>
    %54 = vector.shape_cast %7 : vector<1x1x256xi1> to vector<1x1x256xi1>
    %55 = vector.broadcast %54 : vector<1x1x256xi1> to vector<1x4x256xi1>
    %56 = arith.select %55, %50, %53 : vector<1x4x256xi1>, vector<1x4x256xf32>
    %57 = vector.shape_cast %9 : vector<1x1x256xi1> to vector<1x1x256xi1>
    %58 = vector.broadcast %57 : vector<1x1x256xi1> to vector<1x4x256xi1>
    %59 = arith.select %58, %53, %50 : vector<1x4x256xi1>, vector<1x4x256xf32>
    %60 = tpu.concatenate %32, %20, %35, %44, %10, %47, %56, %23, %59 in 1 : vector<1x4x256xf32>, vector<1x4x256xf32>, vector<1x4x256xf32>, vector<1x4x256xf32>, vector<1x4x256xf32>, vector<1x4x256xf32>, vector<1x4x256xf32>, vector<1x4x256xf32>, vector<1x4x256xf32> -> vector<1x36x256xf32>
    %61 = vector.shape_cast %60 : vector<1x36x256xf32> to vector<36x256xf32>
    %cst = arith.constant dense<0.000000e+00> : vector<4x256xf32>
    %62 = tpu.matmul %11, %61, %cst {dimension_numbers = #tpu.dot_dimension_numbers<[1], [0], [0], [1], [0, 0, 1, 1], [], []>} : vector<4x36xf32>, vector<36x256xf32>, vector<4x256xf32> -> vector<4x256xf32>
    %63 = vector.shape_cast %62 : vector<4x256xf32> to vector<1x4x256xf32>
    %cst_12 = arith.constant dense<0.000000e+00> : vector<1x4xf32>
    %64 = vector.multi_reduction <add>, %63, %cst_12 [2] : vector<1x4x256xf32> to vector<1x4xf32>
    %65 = vector.shape_cast %64 : vector<1x4xf32> to vector<1x4x1xf32>
    %cst_13 = arith.constant 3.906250e-03 : f32
    %66 = vector.broadcast %cst_13 : f32 to vector<1x4x1xf32>
    %67 = arith.mulf %65, %66 : vector<1x4x1xf32>
    %68 = vector.broadcast %67 : vector<1x4x1xf32> to vector<1x4x256xf32>
    %69 = arith.subf %63, %68 : vector<1x4x256xf32>
    %70 = arith.mulf %69, %69 : vector<1x4x256xf32>
    %cst_14 = arith.constant dense<0.000000e+00> : vector<1x4xf32>
    %71 = vector.multi_reduction <add>, %70, %cst_14 [2] : vector<1x4x256xf32> to vector<1x4xf32>
    %72 = vector.shape_cast %71 : vector<1x4xf32> to vector<1x4x1xf32>
    %cst_15 = arith.constant 3.906250e-03 : f32
    %73 = vector.broadcast %cst_15 : f32 to vector<1x4x1xf32>
    %74 = arith.mulf %72, %73 : vector<1x4x1xf32>
    %cst_16 = arith.constant 9.99999974E-6 : f32
    %75 = vector.broadcast %cst_16 : f32 to vector<1x4x1xf32>
    %76 = arith.addf %74, %75 : vector<1x4x1xf32>
    %77 = math.rsqrt %76 : vector<1x4x1xf32>
    %78 = vector.broadcast %77 : vector<1x4x1xf32> to vector<1x4x256xf32>
    %79 = arith.mulf %69, %78 : vector<1x4x256xf32>
    %cst_17 = arith.constant 0.000000e+00 : f32
    %80 = vector.broadcast %cst_17 : f32 to vector<1x4x256xf32>
    %81 = arith.maximumf %79, %80 : vector<1x4x256xf32>
    %c0_18 = arith.constant 0 : index
    %c0_19 = arith.constant 0 : index
    %82 = vector.load %arg5[%c0_18, %c0_19] : memref<4x36xf32, #tpu.memory_space<vmem>>, vector<4x36xf32>
    %83 = vector.extract_strided_slice %81 {offsets = [0, 0, 16], sizes = [1, 4, 240], strides = [1, 1, 1]} : vector<1x4x256xf32> to vector<1x4x240xf32>
    %84 = vector.extract_strided_slice %81 {offsets = [0, 0, 0], sizes = [1, 4, 16], strides = [1, 1, 1]} : vector<1x4x256xf32> to vector<1x4x16xf32>
    %85 = tpu.concatenate %83, %84 in 2 : vector<1x4x240xf32>, vector<1x4x16xf32> -> vector<1x4x256xf32>
    %86 = vector.extract_strided_slice %81 {offsets = [0, 0, 240], sizes = [1, 4, 16], strides = [1, 1, 1]} : vector<1x4x256xf32> to vector<1x4x16xf32>
    %87 = vector.extract_strided_slice %81 {offsets = [0, 0, 0], sizes = [1, 4, 240], strides = [1, 1, 1]} : vector<1x4x256xf32> to vector<1x4x240xf32>
    %88 = tpu.concatenate %86, %87 in 2 : vector<1x4x16xf32>, vector<1x4x240xf32> -> vector<1x4x256xf32>
    %89 = vector.shape_cast %3 : vector<1x1x256xi1> to vector<1x1x256xi1>
    %90 = vector.broadcast %89 : vector<1x1x256xi1> to vector<1x4x256xi1>
    %91 = arith.select %90, %85, %88 : vector<1x4x256xi1>, vector<1x4x256xf32>
    %92 = vector.shape_cast %5 : vector<1x1x256xi1> to vector<1x1x256xi1>
    %93 = vector.broadcast %92 : vector<1x1x256xi1> to vector<1x4x256xi1>
    %94 = arith.select %93, %88, %85 : vector<1x4x256xi1>, vector<1x4x256xf32>
    %95 = vector.extract_strided_slice %91 {offsets = [0, 0, 1], sizes = [1, 4, 255], strides = [1, 1, 1]} : vector<1x4x256xf32> to vector<1x4x255xf32>
    %96 = vector.extract_strided_slice %91 {offsets = [0, 0, 0], sizes = [1, 4, 1], strides = [1, 1, 1]} : vector<1x4x256xf32> to vector<1x4x1xf32>
    %97 = tpu.concatenate %95, %96 in 2 : vector<1x4x255xf32>, vector<1x4x1xf32> -> vector<1x4x256xf32>
    %98 = vector.extract_strided_slice %91 {offsets = [0, 0, 255], sizes = [1, 4, 1], strides = [1, 1, 1]} : vector<1x4x256xf32> to vector<1x4x1xf32>
    %99 = vector.extract_strided_slice %91 {offsets = [0, 0, 0], sizes = [1, 4, 255], strides = [1, 1, 1]} : vector<1x4x256xf32> to vector<1x4x255xf32>
    %100 = tpu.concatenate %98, %99 in 2 : vector<1x4x1xf32>, vector<1x4x255xf32> -> vector<1x4x256xf32>
    %101 = vector.shape_cast %7 : vector<1x1x256xi1> to vector<1x1x256xi1>
    %102 = vector.broadcast %101 : vector<1x1x256xi1> to vector<1x4x256xi1>
    %103 = arith.select %102, %97, %100 : vector<1x4x256xi1>, vector<1x4x256xf32>
    %104 = vector.shape_cast %9 : vector<1x1x256xi1> to vector<1x1x256xi1>
    %105 = vector.broadcast %104 : vector<1x1x256xi1> to vector<1x4x256xi1>
    %106 = arith.select %105, %100, %97 : vector<1x4x256xi1>, vector<1x4x256xf32>
    %107 = vector.extract_strided_slice %81 {offsets = [0, 0, 1], sizes = [1, 4, 255], strides = [1, 1, 1]} : vector<1x4x256xf32> to vector<1x4x255xf32>
    %108 = vector.extract_strided_slice %81 {offsets = [0, 0, 0], sizes = [1, 4, 1], strides = [1, 1, 1]} : vector<1x4x256xf32> to vector<1x4x1xf32>
    %109 = tpu.concatenate %107, %108 in 2 : vector<1x4x255xf32>, vector<1x4x1xf32> -> vector<1x4x256xf32>
    %110 = vector.extract_strided_slice %81 {offsets = [0, 0, 255], sizes = [1, 4, 1], strides = [1, 1, 1]} : vector<1x4x256xf32> to vector<1x4x1xf32>
    %111 = vector.extract_strided_slice %81 {offsets = [0, 0, 0], sizes = [1, 4, 255], strides = [1, 1, 1]} : vector<1x4x256xf32> to vector<1x4x255xf32>
    %112 = tpu.concatenate %110, %111 in 2 : vector<1x4x1xf32>, vector<1x4x255xf32> -> vector<1x4x256xf32>
    %113 = vector.shape_cast %7 : vector<1x1x256xi1> to vector<1x1x256xi1>
    %114 = vector.broadcast %113 : vector<1x1x256xi1> to vector<1x4x256xi1>
    %115 = arith.select %114, %109, %112 : vector<1x4x256xi1>, vector<1x4x256xf32>
    %116 = vector.shape_cast %9 : vector<1x1x256xi1> to vector<1x1x256xi1>
    %117 = vector.broadcast %116 : vector<1x1x256xi1> to vector<1x4x256xi1>
    %118 = arith.select %117, %112, %109 : vector<1x4x256xi1>, vector<1x4x256xf32>
    %119 = vector.extract_strided_slice %94 {offsets = [0, 0, 1], sizes = [1, 4, 255], strides = [1, 1, 1]} : vector<1x4x256xf32> to vector<1x4x255xf32>
    %120 = vector.extract_strided_slice %94 {offsets = [0, 0, 0], sizes = [1, 4, 1], strides = [1, 1, 1]} : vector<1x4x256xf32> to vector<1x4x1xf32>
    %121 = tpu.concatenate %119, %120 in 2 : vector<1x4x255xf32>, vector<1x4x1xf32> -> vector<1x4x256xf32>
    %122 = vector.extract_strided_slice %94 {offsets = [0, 0, 255], sizes = [1, 4, 1], strides = [1, 1, 1]} : vector<1x4x256xf32> to vector<1x4x1xf32>
    %123 = vector.extract_strided_slice %94 {offsets = [0, 0, 0], sizes = [1, 4, 255], strides = [1, 1, 1]} : vector<1x4x256xf32> to vector<1x4x255xf32>
    %124 = tpu.concatenate %122, %123 in 2 : vector<1x4x1xf32>, vector<1x4x255xf32> -> vector<1x4x256xf32>
    %125 = vector.shape_cast %7 : vector<1x1x256xi1> to vector<1x1x256xi1>
    %126 = vector.broadcast %125 : vector<1x1x256xi1> to vector<1x4x256xi1>
    %127 = arith.select %126, %121, %124 : vector<1x4x256xi1>, vector<1x4x256xf32>
    %128 = vector.shape_cast %9 : vector<1x1x256xi1> to vector<1x1x256xi1>
    %129 = vector.broadcast %128 : vector<1x1x256xi1> to vector<1x4x256xi1>
    %130 = arith.select %129, %124, %121 : vector<1x4x256xi1>, vector<1x4x256xf32>
    %131 = tpu.concatenate %103, %91, %106, %115, %81, %118, %127, %94, %130 in 1 : vector<1x4x256xf32>, vector<1x4x256xf32>, vector<1x4x256xf32>, vector<1x4x256xf32>, vector<1x4x256xf32>, vector<1x4x256xf32>, vector<1x4x256xf32>, vector<1x4x256xf32>, vector<1x4x256xf32> -> vector<1x36x256xf32>
    %132 = vector.shape_cast %131 : vector<1x36x256xf32> to vector<36x256xf32>
    %cst_20 = arith.constant dense<0.000000e+00> : vector<4x256xf32>
    %133 = tpu.matmul %82, %132, %cst_20 {dimension_numbers = #tpu.dot_dimension_numbers<[1], [0], [0], [1], [0, 0, 1, 1], [], []>} : vector<4x36xf32>, vector<36x256xf32>, vector<4x256xf32> -> vector<4x256xf32>
    %134 = vector.shape_cast %133 : vector<4x256xf32> to vector<1x4x256xf32>
    %cst_21 = arith.constant dense<0.000000e+00> : vector<1x4xf32>
    %135 = vector.multi_reduction <add>, %134, %cst_21 [2] : vector<1x4x256xf32> to vector<1x4xf32>
    %136 = vector.shape_cast %135 : vector<1x4xf32> to vector<1x4x1xf32>
    %cst_22 = arith.constant 3.906250e-03 : f32
    %137 = vector.broadcast %cst_22 : f32 to vector<1x4x1xf32>
    %138 = arith.mulf %136, %137 : vector<1x4x1xf32>
    %139 = vector.broadcast %138 : vector<1x4x1xf32> to vector<1x4x256xf32>
    %140 = arith.subf %134, %139 : vector<1x4x256xf32>
    %141 = arith.mulf %140, %140 : vector<1x4x256xf32>
    %cst_23 = arith.constant dense<0.000000e+00> : vector<1x4xf32>
    %142 = vector.multi_reduction <add>, %141, %cst_23 [2] : vector<1x4x256xf32> to vector<1x4xf32>
    %143 = vector.shape_cast %142 : vector<1x4xf32> to vector<1x4x1xf32>
    %cst_24 = arith.constant 3.906250e-03 : f32
    %144 = vector.broadcast %cst_24 : f32 to vector<1x4x1xf32>
    %145 = arith.mulf %143, %144 : vector<1x4x1xf32>
    %cst_25 = arith.constant 9.99999974E-6 : f32
    %146 = vector.broadcast %cst_25 : f32 to vector<1x4x1xf32>
    %147 = arith.addf %145, %146 : vector<1x4x1xf32>
    %148 = math.rsqrt %147 : vector<1x4x1xf32>
    %149 = vector.broadcast %148 : vector<1x4x1xf32> to vector<1x4x256xf32>
    %150 = arith.mulf %140, %149 : vector<1x4x256xf32>
    %151 = arith.addf %10, %150 : vector<1x4x256xf32>
    %c0_26 = arith.constant 0 : index
    %c0_27 = arith.constant 0 : index
    %c0_28 = arith.constant 0 : index
    %152 = vector.load %arg6[%c0_26, %c0_27, %c0_28] : memref<1x4x256xf32, #tpu.memory_space<vmem>>, vector<1x4x256xf32>
    tpu.vector_store %arg6[%c0_26, %c0_27, %c0_28], %151 {strides = array<i32>} : memref<1x4x256xf32, #tpu.memory_space<vmem>>, vector<1x4x256xf32>,
    return
  }
  func.func @transform_0(%arg0: i32) -> (i32, i32, i32) {
    %c0_i32 = arith.constant 0 : i32
    %c0_i32_0 = arith.constant 0 : i32
    %c0_i32_1 = arith.constant 0 : i32
    return %arg0, %c0_i32, %c0_i32_0 : i32, i32, i32
  }
  func.func @transform_1(%arg0: i32) -> (i32, i32, i32) {
    %c0_i32 = arith.constant 0 : i32
    %c0_i32_0 = arith.constant 0 : i32
    %c0_i32_1 = arith.constant 0 : i32
    %c0_i32_2 = arith.constant 0 : i32
    return %c0_i32, %c0_i32_0, %c0_i32_1 : i32, i32, i32
  }
  func.func @transform_2(%arg0: i32) -> (i32, i32, i32) {
    %c0_i32 = arith.constant 0 : i32
    %c0_i32_0 = arith.constant 0 : i32
    %c0_i32_1 = arith.constant 0 : i32
    %c0_i32_2 = arith.constant 0 : i32
    return %c0_i32, %c0_i32_0, %c0_i32_1 : i32, i32, i32
  }
  func.func @transform_3(%arg0: i32) -> (i32, i32) {
    %c0_i32 = arith.constant 0 : i32
    %c0_i32_0 = arith.constant 0 : i32
    %c0_i32_1 = arith.constant 0 : i32
    return %c0_i32, %c0_i32_0 : i32, i32
  }
  func.func @transform_4(%arg0: i32) -> (i32, i32) {
    %c0_i32 = arith.constant 0 : i32
    %c0_i32_0 = arith.constant 0 : i32
    %c0_i32_1 = arith.constant 0 : i32
    return %c0_i32, %c0_i32_0 : i32, i32
  }
  func.func @transform_5(%arg0: i32) -> (i32, i32, i32) {
    %c0_i32 = arith.constant 0 : i32
    %c0_i32_0 = arith.constant 0 : i32
    %c0_i32_1 = arith.constant 0 : i32
    return %arg0, %c0_i32, %c0_i32_0 : i32, i32, i32
  }
}

</mosaic_0001>

<llo_original>
// kernel: tile.9
$region0: #{tile.9}
  %s0 = inlined_call_operand.vmem [shape: s32[16,16], index: 0, kind: input, shape index: {}]
  %s1 = inlined_call_operand.vmem [shape: s32[1,1,256], index: 1, kind: output, shape index: {}]
  $region1: #{tile.9} parent=0
    #allocation0 [shape = 'u8[8192]{0}', space=vmem, size = 0x2000, scoped, tag = 'scoped mem for output reshape']
    %s2 = smov 3
    %v3 = vld [vmem:[%s0] ss:$8 sm:%s2]
    %vm4 = vcmask 130048
    %5 = vst.msk [vmem:[#allocation0] ss:$8 sm:$0x3] %vm4, %v3
    %s6 = scalar_lea.vmem %s0, 7
    %s7 = smov 3
    %v8 = vld [vmem:[%s6] ss:$8 sm:%s7]
    %9 = vrot.lane.b32.xlu0 %v8, 112
    %v10 = vpop.permute.xlu0 %9
    %vm11 = vcmask 1048448
    %12 = vst.msk [vmem:[#allocation0] ss:$8 sm:$0x3] %vm11, %v10
    %s13 = scalar_lea.vmem %s0, 6
    %s14 = smov 3
    %v15 = vld [vmem:[%s13] ss:$8 sm:%s14]
    %16 = vrot.lane.b32.xlu0 %v15, 96
    %v17 = vpop.permute.xlu0 %16
    %vm18 = vcmask 917248
    %19 = vst.msk [vmem:[#allocation0] ss:$8 sm:$0x3] %vm18, %v17
    %s20 = scalar_lea.vmem %s0, 5
    %s21 = smov 3
    %v22 = vld [vmem:[%s20] ss:$8 sm:%s21]
    %23 = vrot.lane.b32.xlu0 %v22, 80
    %v24 = vpop.permute.xlu0 %23
    %vm25 = vcmask 786048
    %26 = vst.msk [vmem:[#allocation0] ss:$8 sm:$0x3] %vm25, %v24
    %s27 = scalar_lea.vmem %s0, 4
    %s28 = smov 3
    %v29 = vld [vmem:[%s27] ss:$8 sm:%s28]
    %30 = vrot.lane.b32.xlu0 %v29, 64
    %v31 = vpop.permute.xlu0 %30
    %vm32 = vcmask 654848
    %33 = vst.msk [vmem:[#allocation0] ss:$8 sm:$0x3] %vm32, %v31
    %s34 = scalar_lea.vmem %s0, 3
    %s35 = smov 3
    %v36 = vld [vmem:[%s34] ss:$8 sm:%s35]
    %37 = vrot.lane.b32.xlu0 %v36, 48
    %v38 = vpop.permute.xlu0 %37
    %vm39 = vcmask 523648
    %40 = vst.msk [vmem:[#allocation0] ss:$8 sm:$0x3] %vm39, %v38
    %s41 = scalar_lea.vmem %s0, 2
    %s42 = smov 3
    %v43 = vld [vmem:[%s41] ss:$8 sm:%s42]
    %44 = vrot.lane.b32.xlu0 %v43, 32
    %v45 = vpop.permute.xlu0 %44
    %vm46 = vcmask 392448
    %47 = vst.msk [vmem:[#allocation0] ss:$8 sm:$0x3] %vm46, %v45
    %s48 = scalar_lea.vmem %s0, 1
    %s49 = smov 3
    %v50 = vld [vmem:[%s48] ss:$8 sm:%s49]
    %51 = vrot.lane.b32.xlu0 %v50, 16
    %v52 = vpop.permute.xlu0 %51
    %vm53 = vcmask 261248
    %54 = vst.msk [vmem:[#allocation0] ss:$8 sm:$0x3] %vm53, %v52
    %s56 = ssub.s32 2, 1
    %v57 = vld [vmem:[#allocation0] sm:%s56]
    %s59 = ssub.s32 2, 1
    %60 = vst [vmem:[%s1] sm:%s59] %v57
    %s61 = scalar_lea.vmem [#allocation0], 8
    %v62 = vld [vmem:[%s61] sm:%s56]
    %s64 = ssub.s32 2, 1
    %s65 = scalar_lea.vmem %s1, 1
    %66 = vst [vmem:[%s65] sm:%s64] %v62

// kernel: residual_block_forward.1
$region0: #{residual_block_forward.1}
  #allocation0 [shape = 'u32[]', space=smem, size = 0x4, offset = 0x4, fixed_abs, tag = 'smem constant byte address 0x4 - core index']
  #allocation1 [shape = 'u32[72,128]{1,0:T(1,128)}', space=vmem, size = 0x9000, scoped, tag = 'internal scratch']
  %s0 = inlined_call_operand.vmem [shape: f32[2,4,256], index: 0, kind: input, shape index: {}]
  %s1 = inlined_call_operand.vmem [shape: s32[1,1,256], index: 1, kind: input, shape index: {}]
  %s2 = inlined_call_operand.vmem [shape: s32[1,1,256], index: 2, kind: input, shape index: {}]
  %s3 = inlined_call_operand.vmem [shape: f32[4,36], index: 3, kind: input, shape index: {}]
  %s4 = inlined_call_operand.vmem [shape: f32[4,36], index: 4, kind: input, shape index: {}]
  %s5 = inlined_call_operand.vmem [shape: f32[2,4,256], index: 5, kind: output, shape index: {}]
  %s6 = sld [smem:[#allocation0]]
  $region53: #{residual_block_forward.1} parent=0
    _
  %s8 = ssub.s32 1, %s6
  %s9 = scalar_select 0, %s8, %s6
  loop: start=0, step=1, limit=4
  $region2: #{residual_block_forward.1} parent=0 // loop_pre_header
    _
  $region3: #{residual_block_forward.1} parent=0 // loop_header
    %s11 = sphi 0, %s15
    %p12 = scmp.ge.s32.totalorder %s11, 4
    %s21 = sphi 0, %s23
    %s24 = sphi 0, %s21
    %s25 = sphi 0, %s24
    %s41 = sphi 0, %s25
    %s45 = sphi 0, %s45
    %s47 = sphi 0, %s45
    %s48 = sphi 0, %s47
    %s62 = sphi 0, %s48
    %s66 = sphi 0, %s66
    %s68 = sphi 0, %s66
    %s69 = sphi 0, %s68
    %s83 = sphi 0, %s69
    %s87 = sphi 0, %s87
    %s89 = sphi 0, %s87
    %s90 = sphi 0, %s89
    %s104 = sphi 0, %s90
    %s108 = sphi 0, %s108
    %s110 = sphi 0, %s108
    %s111 = sphi 0, %s110
    %s125 = sphi 0, %s111
    %s131 = sphi 0, %s133
    %s134 = sphi 0, %s131
    %s135 = sphi 0, %s134
    %s151 = sphi 0, %s135
  $region4: #{residual_block_forward.1} parent=0 // loop_header_branch
    %14 = sbr.rel (%p12) target = $region8
  $region5: #{residual_block_forward.1} parent=0 // loop_body
    %s16 = ssub.s32 %s11, 1
    %s17 = ssub.s32 %s11, 2
    %s18 = sadd.s32 %s11, 1
    %s19 = ssub.s32 %s11, %s18
    %p20 = scmp.eq.s32.totalorder %s19, 0
    %s22 = sadd.s32 %s21, 1
    %s23 = scalar_select %p20, %s21, %s22
    %p26 = pneg %p20
    %p27 = scmp.eq.s32.totalorder %s11, 1
    %p28 = por %p26, %p27
    %p29 = scmp.ne.s32.totalorder %s21, %s24
    %p30 = scmp.eq.s32.totalorder %s11, 0
    %p31 = por %p29, %p30
    %p32 = scmp.ne.s32.totalorder %s21, %s24
    %p33 = scmp.eq.s32.totalorder %s16, 1
    %p34 = por %p32, %p33
    %p35 = scmp.ne.s32.totalorder %s24, %s25
    %p36 = scmp.eq.s32.totalorder %s16, 0
    %p37 = por %p35, %p36
    %p38 = scmp.ne.s32.totalorder %s24, %s25
    %p39 = scmp.eq.s32.totalorder %s17, 1
    %p40 = por %p38, %p39
    %p42 = scmp.ne.s32.totalorder %s25, %s41
    %p43 = scmp.eq.s32.totalorder %s17, 0
    %p44 = por %p42, %p43
    %s46 = sadd.s32 %s45, 1
    %p49 = scmp.eq.s32.totalorder %s11, 1
    %p50 = scmp.ne.s32.totalorder %s45, %s47
    %p51 = scmp.eq.s32.totalorder %s11, 0
    %p52 = por %p50, %p51
    %p53 = scmp.ne.s32.totalorder %s45, %s47
    %p54 = scmp.eq.s32.totalorder %s16, 1
    %p55 = por %p53, %p54
    %p56 = scmp.ne.s32.totalorder %s47, %s48
    %p57 = scmp.eq.s32.totalorder %s16, 0
    %p58 = por %p56, %p57
    %p59 = scmp.ne.s32.totalorder %s47, %s48
    %p60 = scmp.eq.s32.totalorder %s17, 1
    %p61 = por %p59, %p60
    %p63 = scmp.ne.s32.totalorder %s48, %s62
    %p64 = scmp.eq.s32.totalorder %s17, 0
    %p65 = por %p63, %p64
    %s67 = sadd.s32 %s66, 1
    %p70 = scmp.eq.s32.totalorder %s11, 1
    %p71 = scmp.ne.s32.totalorder %s66, %s68
    %p72 = scmp.eq.s32.totalorder %s11, 0
    %p73 = por %p71, %p72
    %p74 = scmp.ne.s32.totalorder %s66, %s68
    %p75 = scmp.eq.s32.totalorder %s16, 1
    %p76 = por %p74, %p75
    %p77 = scmp.ne.s32.totalorder %s68, %s69
    %p78 = scmp.eq.s32.totalorder %s16, 0
    %p79 = por %p77, %p78
    %p80 = scmp.ne.s32.totalorder %s68, %s69
    %p81 = scmp.eq.s32.totalorder %s17, 1
    %p82 = por %p80, %p81
    %p84 = scmp.ne.s32.totalorder %s69, %s83
    %p85 = scmp.eq.s32.totalorder %s17, 0
    %p86 = por %p84, %p85
    %s88 = sadd.s32 %s87, 1
    %p91 = scmp.eq.s32.totalorder %s11, 1
    %p92 = scmp.ne.s32.totalorder %s87, %s89
    %p93 = scmp.eq.s32.totalorder %s11, 0
    %p94 = por %p92, %p93
    %p95 = scmp.ne.s32.totalorder %s87, %s89
    %p96 = scmp.eq.s32.totalorder %s16, 1
    %p97 = por %p95, %p96
    %p98 = scmp.ne.s32.totalorder %s89, %s90
    %p99 = scmp.eq.s32.totalorder %s16, 0
    %p100 = por %p98, %p99
    %p101 = scmp.ne.s32.totalorder %s89, %s90
    %p102 = scmp.eq.s32.totalorder %s17, 1
    %p103 = por %p101, %p102
    %p105 = scmp.ne.s32.totalorder %s90, %s104
    %p106 = scmp.eq.s32.totalorder %s17, 0
    %p107 = por %p105, %p106
    %s109 = sadd.s32 %s108, 1
    %p112 = scmp.eq.s32.totalorder %s11, 1
    %p113 = scmp.ne.s32.totalorder %s108, %s110
    %p114 = scmp.eq.s32.totalorder %s11, 0
    %p115 = por %p113, %p114
    %p116 = scmp.ne.s32.totalorder %s108, %s110
    %p117 = scmp.eq.s32.totalorder %s16, 1
    %p118 = por %p116, %p117
    %p119 = scmp.ne.s32.totalorder %s110, %s111
    %p120 = scmp.eq.s32.totalorder %s16, 0
    %p121 = por %p119, %p120
    %p122 = scmp.ne.s32.totalorder %s110, %s111
    %p123 = scmp.eq.s32.totalorder %s17, 1
    %p124 = por %p122, %p123
    %p126 = scmp.ne.s32.totalorder %s111, %s125
    %p127 = scmp.eq.s32.totalorder %s17, 0
    %p128 = por %p126, %p127
    %s129 = ssub.s32 %s11, %s18
    %p130 = scmp.eq.s32.totalorder %s129, 0
    %s132 = sadd.s32 %s131, 1
    %s133 = scalar_select %p130, %s131, %s132
    %p136 = pneg %p130
    %p137 = scmp.eq.s32.totalorder %s11, 1
    %p138 = por %p136, %p137
    %p139 = scmp.ne.s32.totalorder %s131, %s134
    %p140 = scmp.eq.s32.totalorder %s11, 0
    %p141 = por %p139, %p140
    %p142 = scmp.ne.s32.totalorder %s131, %s134
    %p143 = scmp.eq.s32.totalorder %s16, 1
    %p144 = por %p142, %p143
    %p145 = scmp.ne.s32.totalorder %s134, %s135
    %p146 = scmp.eq.s32.totalorder %s16, 0
    %p147 = por %p145, %p146
    %p148 = scmp.ne.s32.totalorder %s134, %s135
    %p149 = scmp.eq.s32.totalorder %s17, 1
    %p150 = por %p148, %p149
    %p152 = scmp.ne.s32.totalorder %s135, %s151
    %p153 = scmp.eq.s32.totalorder %s17, 0
    %p154 = por %p152, %p153
    %p155 = scmp.le.s32.totalorder 1, %s11
    %p156 = scmp.lt.s32.totalorder %s11, 3
    %p157 = pnand %p155, %p156
    %p158 = pneg %p157
    // Predicated region
    $region9: #{residual_block_forward.1} parent=5 // pred_check
      _
    $region10: #{residual_block_forward.1} parent=5 // pred_check_branch
      %160 = sbr.rel (%p157) target = $region12
    $region11: #{residual_block_forward.1} parent=5 // pred_region
      %s161 = ssub.s32 %s11, 1
      // Predicated region
      $region13: #{residual_block_forward.1} parent=11 // pred_check
        %p162 = pneg %p58
      $region14: #{residual_block_forward.1} parent=11 // pred_check_branch
        %164 = sbr.rel (%p162) target = $region16
      $region15: #{residual_block_forward.1} parent=11 // pred_region
        _
      $region16: #{residual_block_forward.1} parent=11 // pred_fallthru
        _
      // Predicated region
      $region17: #{residual_block_forward.1} parent=11 // pred_check
        %p165 = pneg %p79
      $region18: #{residual_block_forward.1} parent=11 // pred_check_branch
        %167 = sbr.rel (%p165) target = $region20
      $region19: #{residual_block_forward.1} parent=11 // pred_region
        _
      $region20: #{residual_block_forward.1} parent=11 // pred_fallthru
        _
      // Predicated region
      $region21: #{residual_block_forward.1} parent=11 // pred_check
        %p168 = pneg %p100
      $region22: #{residual_block_forward.1} parent=11 // pred_check_branch
        %170 = sbr.rel (%p168) target = $region24
      $region23: #{residual_block_forward.1} parent=11 // pred_region
        _
      $region24: #{residual_block_forward.1} parent=11 // pred_fallthru
        _
      // Predicated region
      $region25: #{residual_block_forward.1} parent=11 // pred_check
        %p171 = pneg %p121
      $region26: #{residual_block_forward.1} parent=11 // pred_check_branch
        %173 = sbr.rel (%p171) target = $region28
      $region27: #{residual_block_forward.1} parent=11 // pred_region
        _
      $region28: #{residual_block_forward.1} parent=11 // pred_fallthru
        _
    $region12: #{residual_block_forward.1} parent=5 // pred_fallthru
      _
    %p174 = scmp.lt.s32.totalorder %s11, 2
    // Predicated region
    $region29: #{residual_block_forward.1} parent=5 // pred_check
      %p175 = pneg %p174
    $region30: #{residual_block_forward.1} parent=5 // pred_check_branch
      %177 = sbr.rel (%p175) target = $region32
    $region31: #{residual_block_forward.1} parent=5 // pred_region
      // Predicated region
      $region33: #{residual_block_forward.1} parent=31 // pred_check
        %p178 = pneg %p31
      $region34: #{residual_block_forward.1} parent=31 // pred_check_branch
        %180 = sbr.rel (%p178) target = $region36
      $region35: #{residual_block_forward.1} parent=31 // pred_region
        %p181 = scmp.lt.s32.totalorder %s11, 1
        %s182 = scalar_select %p181, %s11, 1
        %s183 = smul.addr %s182, 2
        %s184 = smul.addr %s183, 4
        %s185 = scalar_lea.vmem %s0, %s184
      $region36: #{residual_block_forward.1} parent=31 // pred_fallthru
        _
    $region32: #{residual_block_forward.1} parent=5 // pred_fallthru
      _
    %p186 = scmp.le.s32.totalorder 1, %s11
    %p187 = scmp.lt.s32.totalorder %s11, 3
    %p188 = pnand %p186, %p187
    %p189 = pneg %p188
    // Predicated region
    $region37: #{residual_block_forward.1} parent=5 // pred_check
      _
    $region38: #{residual_block_forward.1} parent=5 // pred_check_branch
      %191 = sbr.rel (%p188) target = $region40
    $region39: #{residual_block_forward.1} parent=5 // pred_region
      %s192 = ssub.s32 %s11, 1
      %p193 = scmp.lt.s32.totalorder %s16, 1
      %s194 = scalar_select %p193, %s16, 1
      %s195 = smul.addr %s194, 2
      %s196 = smul.addr %s195, 4
      %s197 = scalar_lea.vmem %s0, %s196
      %p198 = pneg %p37
      %p199 = pneg %p34
      %p200 = pneg %p58
      %p201 = pneg %p55
      %p202 = pneg %p79
      %p203 = pneg %p76
      %p204 = pneg %p100
      %p205 = pneg %p97
      %p206 = pneg %p121
      %p207 = pneg %p118
      %p208 = pneg %p147
      %p209 = pneg %p144
      %p210 = scmp.lt.s32.totalorder %s16, 1
      %s211 = scalar_select %p210, %s16, 1
      %s212 = smul.addr %s211, 2
      %s213 = smul.addr %s212, 4
      %s214 = scalar_lea.vmem %s5, %s213
      %p215 = scmp.lt.s32.totalorder %s16, 1
      %s216 = scalar_select %p215, %s16, 1
      %s217 = smul.addr %s216, 2
      %s218 = smul.addr %s217, 4
      %s219 = scalar_lea.vmem %s0, %s218
      %p220 = scmp.lt.s32.totalorder %s16, 1
      %s221 = scalar_select %p220, %s16, 1
      %s222 = smul.addr %s221, 2
      %s223 = smul.addr %s222, 4
      %s224 = scalar_lea.vmem %s5, %s223
      %v225 = vld [vmem:[%s1] sm:$0x3]
      %v226 = vld [vmem:[%s2] sm:$0x3]
      %vm227 = vcmp.eq.s32.totalorder %v225, 0
      %vm228 = vcmp.eq.s32.totalorder %v225, 15
      %vm229 = vcmp.eq.s32.totalorder %v226, 0
      %vm230 = vcmp.eq.s32.totalorder %v226, 15
      %v231 = vld [vmem:[%s219] sm:$0xff]
      %v232 = vld [vmem:[%s3] sm:$0xf]
      %234 = vst [vmem:[#allocation1] ss:$2 sm:$0xff] %v231
      %v235 = vld.sshfl [vmem:[#allocation1] sm:$0xff pattern:$0x75316420]
      %v236 = vld.sshfl [vmem:[#allocation1 + $0x8] sm:$0xff pattern:$0x75316420]
      %237 = vrot.lane.b32.xlu0 %v235, 112
      %v238 = vpop.permute.xlu0 %237
      %239 = vrot.lane.b32.xlu0 %v236, 112
      %v240 = vpop.permute.xlu0 %239
      %vm241 = vcmask 916480
      %v242 = vsel %vm241, %v238, %v240
      %245 = vst [vmem:[#allocation1] ss:$2 sm:$0xff] %v231
      %v246 = vld.sshfl [vmem:[#allocation1] sm:$0xff pattern:$0x75316420]
      %247 = vrot.lane.b32.xlu0 %v246, 112
      %v248 = vpop.permute.xlu0 %247
      %v250 = vsel %vm241, %v240, %v248
      %251 = vst [vmem:[#allocation1] ss:$2 sm:$0xff] %v231
      %v252 = vld.sshfl [vmem:[#allocation1 + $0x8] sm:$0xff pattern:$0x75316420]
      %253 = vrot.lane.b32.xlu0 %v252, 16
      %v254 = vpop.permute.xlu0 %253
      %256 = vst [vmem:[#allocation1] ss:$2 sm:$0xff] %v231
      %v257 = vld.sshfl [vmem:[#allocation1] sm:$0xff pattern:$0x75316420]
      %v258 = vld.sshfl [vmem:[#allocation1 + $0x8] sm:$0xff pattern:$0x75316420]
      %259 = vrot.lane.b32.xlu0 %v257, 16
      %v260 = vpop.permute.xlu0 %259
      %261 = vrot.lane.b32.xlu0 %v258, 16
      %v262 = vpop.permute.xlu0 %261
      %vm263 = vcmask 130048
      %v264 = vsel %vm263, %v260, %v262
      %v267 = vsel %vm263, %v254, %v260
      %v268 = vsel %vm227, 1, 0
      %v269 = vperm.slane %v268, 0
      %v270 = vperm.slane %v268, 1
      %vm271 = vcmp.eq.s32.totalorder %v269, 1
      %vm272 = vcmp.eq.s32.totalorder %v270, 1
      %v273 = vsel %vm271, %v242, %v267
      %v274 = vsel %vm272, %v250, %v264
      %v275 = vsel %vm228, 1, 0
      %v276 = vperm.slane %v275, 0
      %v277 = vperm.slane %v275, 1
      %vm278 = vcmp.eq.s32.totalorder %v276, 1
      %vm279 = vcmp.eq.s32.totalorder %v277, 1
      %v280 = vsel %vm278, %v267, %v242
      %v281 = vsel %vm279, %v264, %v250
      %284 = vrot.lane.b32.xlu0 %v273, 127
      %v285 = vpop.permute.xlu0 %284
      %286 = vrot.lane.b32.xlu0 %v274, 127
      %v287 = vpop.permute.xlu0 %286
      %vm288 = vcmask 1039360
      %v289 = vsel %vm288, %v285, %v287
      %v293 = vsel %vm288, %v287, %v285
      %294 = vrot.lane.b32.xlu0 %v274, 1
      %v295 = vpop.permute.xlu0 %294
      %297 = vrot.lane.b32.xlu0 %v273, 1
      %v298 = vpop.permute.xlu0 %297
      %vm299 = vcmask 7168
      %v300 = vsel %vm299, %v298, %v295
      %v303 = vsel %vm299, %v295, %v298
      %v304 = vsel %vm229, 1, 0
      %v305 = vperm.slane %v304, 0
      %v306 = vperm.slane %v304, 1
      %vm307 = vcmp.eq.s32.totalorder %v305, 1
      %vm308 = vcmp.eq.s32.totalorder %v306, 1
      %v309 = vsel %vm307, %v289, %v303
      %v310 = vsel %vm308, %v293, %v300
      %v311 = vsel %vm230, 1, 0
      %v312 = vperm.slane %v311, 0
      %v313 = vperm.slane %v311, 1
      %vm314 = vcmp.eq.s32.totalorder %v312, 1
      %vm315 = vcmp.eq.s32.totalorder %v313, 1
      %v316 = vsel %vm314, %v303, %v289
      %v317 = vsel %vm315, %v300, %v293
      %318 = vst [vmem:[#allocation1] ss:$2 sm:$0xff] %v231
      %v319 = vld.sshfl [vmem:[#allocation1] sm:$0xff pattern:$0x75316420]
      %v320 = vld.sshfl [vmem:[#allocation1 + $0x8] sm:$0xff pattern:$0x75316420]
      %321 = vrot.lane.b32.xlu0 %v319, 127
      %v322 = vpop.permute.xlu0 %321
      %323 = vrot.lane.b32.xlu0 %v320, 127
      %v324 = vpop.permute.xlu0 %323
      %v325 = vsel %vm288, %v322, %v324
      %328 = vst [vmem:[#allocation1] ss:$2 sm:$0xff] %v231
      %v329 = vld.sshfl [vmem:[#allocation1] sm:$0xff pattern:$0x75316420]
      %330 = vrot.lane.b32.xlu0 %v329, 127
      %v331 = vpop.permute.xlu0 %330
      %v333 = vsel %vm288, %v324, %v331
      %334 = vst [vmem:[#allocation1] ss:$2 sm:$0xff] %v231
      %v335 = vld.sshfl [vmem:[#allocation1 + $0x8] sm:$0xff pattern:$0x75316420]
      %336 = vrot.lane.b32.xlu0 %v335, 1
      %v337 = vpop.permute.xlu0 %336
      %339 = vst [vmem:[#allocation1] ss:$2 sm:$0xff] %v231
      %v340 = vld.sshfl [vmem:[#allocation1] sm:$0xff pattern:$0x75316420]
      %v341 = vld.sshfl [vmem:[#allocation1 + $0x8] sm:$0xff pattern:$0x75316420]
      %342 = vrot.lane.b32.xlu0 %v340, 1
      %v343 = vpop.permute.xlu0 %342
      %344 = vrot.lane.b32.xlu0 %v341, 1
      %v345 = vpop.permute.xlu0 %344
      %v346 = vsel %vm299, %v343, %v345
      %v349 = vsel %vm299, %v337, %v343
      %v350 = vsel %vm307, %v325, %v349
      %v351 = vsel %vm308, %v333, %v346
      %v352 = vsel %vm314, %v349, %v325
      %v353 = vsel %vm315, %v346, %v333
      %356 = vrot.lane.b32.xlu0 %v280, 127
      %v357 = vpop.permute.xlu0 %356
      %358 = vrot.lane.b32.xlu0 %v281, 127
      %v359 = vpop.permute.xlu0 %358
      %v360 = vsel %vm288, %v357, %v359
      %v364 = vsel %vm288, %v359, %v357
      %365 = vrot.lane.b32.xlu0 %v281, 1
      %v366 = vpop.permute.xlu0 %365
      %368 = vrot.lane.b32.xlu0 %v280, 1
      %v369 = vpop.permute.xlu0 %368
      %v370 = vsel %vm299, %v369, %v366
      %v373 = vsel %vm299, %v366, %v369
      %v374 = vsel %vm307, %v360, %v373
      %v375 = vsel %vm308, %v364, %v370
      %v376 = vsel %vm314, %v373, %v360
      %v377 = vsel %vm315, %v370, %v364
      %v378 = vrot.slane %v273, 4
      %v379 = vrot.slane %v274, 4
      %v384 = vrot.slane %v350, 4
      %v385 = vrot.slane %v351, 4
      %388 = vst [vmem:[#allocation1] ss:$2 sm:$0xff] %v231
      %v389 = vld.sshfl [vmem:[#allocation1] sm:$0xff pattern:$0x75316420]
      %v390 = vld.sshfl [vmem:[#allocation1 + $0x8] sm:$0xff pattern:$0x75316420]
      %v395 = vrot.slane %v352, 4
      %v396 = vrot.slane %v353, 4
      %v399 = vrot.slane %v280, 4
      %v400 = vrot.slane %v281, 4
      %vm403 = vcmask 1043456
      %v404 = vsel %vm403, %v309, %v378
      %v405 = vsel %vm403, %v310, %v379
      %v406 = vsel %vm403, %v316, %v384
      %v407 = vsel %vm403, %v317, %v385
      %v408 = vsel %vm403, %v389, %v395
      %v409 = vsel %vm403, %v390, %v396
      %v410 = vsel %vm403, %v374, %v399
      %v411 = vsel %vm403, %v375, %v400
      %vm412 = vcmask 293888
      %v414 = vsel %vm412, %v232, 0
      %v417 = vsel %vm403, %v376, 0
      %v420 = vsel %vm403, %v377, 0
      %422 = vmatpush.msra.mxu0 0.0
      %423 = vmatpush.msra.mxu0 0.0
      %424 = vmatpush.msra.mxu0 0.0
      %425 = vmatpush.msra.mxu0 0.0
      %426 = vmatpush.msra.mxu0 0.0
      %427 = vmatpush.msra.mxu0 0.0
      %428 = vmatpush.msra.mxu0 0.0
      %429 = vmatpush.msra.mxu0 0.0
      %430 = vmatpush.msra.mxu0 0.0
      %431 = vmatpush.msra.mxu0 0.0
      %432 = vmatpush.msra.mxu0 0.0
      %433 = vmatpush.msra.mxu0 %v417
      %434 = vmatpush.msra.mxu0 %v410
      %435 = vmatpush.msra.mxu0 %v408
      %436 = vmatpush.msra.mxu0 %v406
      %437 = vmatpush.msra.mxu0 %v404
      %438 = vmatmul.f32.gmra.mxu0 %v414
      %v439 = vpop.f32.mrf.mxu0
      %v440 = vadd.f32 0.0, %v439
      %441 = vdwg.mxu0
      %442 = vmatpush.msra.mxu0 0.0
      %443 = vmatpush.msra.mxu0 0.0
      %444 = vmatpush.msra.mxu0 0.0
      %445 = vmatpush.msra.mxu0 0.0
      %446 = vmatpush.msra.mxu0 0.0
      %447 = vmatpush.msra.mxu0 0.0
      %448 = vmatpush.msra.mxu0 0.0
      %449 = vmatpush.msra.mxu0 0.0
      %450 = vmatpush.msra.mxu0 0.0
      %451 = vmatpush.msra.mxu0 0.0
      %452 = vmatpush.msra.mxu0 0.0
      %453 = vmatpush.msra.mxu0 %v420
      %454 = vmatpush.msra.mxu0 %v411
      %455 = vmatpush.msra.mxu0 %v409
      %456 = vmatpush.msra.mxu0 %v407
      %457 = vmatpush.msra.mxu0 %v405
      %458 = vmatmul.f32.gmra.mxu0 %v414
      %v459 = vpop.f32.mrf.mxu0
      %v460 = vadd.f32 0.0, %v459
      %461 = vdwg.mxu0
      %v462 = vsel %vm403, %v440, 0.0
      %v463 = vsel %vm403, %v460, 0.0
      %v464 = vadd.f32 %v462, %v463
      %465 = vadd.xlane.f32.xlu0 %v464
      %v466 = vpop.xlane.xlu0 %465
      %v467 = vmul.f32 %v466, 0.00390625
      %v468 = vsub.f32 %v440, %v467
      %v469 = vsub.f32 %v460, %v467
      %v470 = vmul.f32 %v468, %v468
      %v471 = vmul.f32 %v469, %v469
      %v472 = vsel %vm403, %v470, 0.0
      %v473 = vsel %vm403, %v471, 0.0
      %v474 = vadd.f32 %v472, %v473
      %475 = vadd.xlane.f32.xlu0 %v474
      %v476 = vpop.xlane.xlu0 %475
      %v477 = vmul.f32 %v476, 0.00390625
      %v478 = vadd.f32 %v477, 1e-05
      %v479 = vrsqrt.pop %v478
      %v480 = vmul.f32 %v479, %v478
      %v481 = vmul.f32 %v480, %v479
      %v482 = vmul.f32 0.5, %v481
      %v483 = vsub.f32 1.5, %v482
      %v484 = vmul.f32 %v479, %v483
      %vm485 = vweird.f32 %v478
      %vm486 = vweird.f32 %v479
      %vm487 = vmor %vm485, %vm486
      %v488 = vsel %vm487, %v479, %v484
      %v489 = vmul.f32 %v468, %v488
      %v490 = vmul.f32 %v469, %v488
      %v491 = vmax.f32 %v489, 0.0
      %v492 = vmax.f32 %v490, 0.0
      %v493 = vld [vmem:[%s4] sm:$0xf]
      %496 = vrot.lane.b32.xlu0 %v491, 112
      %v497 = vpop.permute.xlu0 %496
      %498 = vrot.lane.b32.xlu0 %v492, 112
      %v499 = vpop.permute.xlu0 %498
      %v500 = vsel %vm241, %v497, %v499
      %v504 = vsel %vm241, %v499, %v497
      %505 = vrot.lane.b32.xlu0 %v492, 16
      %v506 = vpop.permute.xlu0 %505
      %508 = vrot.lane.b32.xlu0 %v491, 16
      %v509 = vpop.permute.xlu0 %508
      %v510 = vsel %vm263, %v509, %v506
      %v513 = vsel %vm263, %v506, %v509
      %v514 = vsel %vm271, %v500, %v513
      %v515 = vsel %vm272, %v504, %v510
      %v516 = vsel %vm278, %v513, %v500
      %v517 = vsel %vm279, %v510, %v504
      %520 = vrot.lane.b32.xlu0 %v514, 127
      %v521 = vpop.permute.xlu0 %520
      %522 = vrot.lane.b32.xlu0 %v515, 127
      %v523 = vpop.permute.xlu0 %522
      %v524 = vsel %vm288, %v521, %v523
      %v528 = vsel %vm288, %v523, %v521
      %529 = vrot.lane.b32.xlu0 %v515, 1
      %v530 = vpop.permute.xlu0 %529
      %532 = vrot.lane.b32.xlu0 %v514, 1
      %v533 = vpop.permute.xlu0 %532
      %v534 = vsel %vm299, %v533, %v530
      %v537 = vsel %vm299, %v530, %v533
      %v538 = vsel %vm307, %v524, %v537
      %v539 = vsel %vm308, %v528, %v534
      %v540 = vsel %vm314, %v537, %v524
      %v541 = vsel %vm315, %v534, %v528
      %542 = vrot.lane.b32.xlu0 %v491, 127
      %v543 = vpop.permute.xlu0 %542
      %544 = vrot.lane.b32.xlu0 %v492, 127
      %v545 = vpop.permute.xlu0 %544
      %v546 = vsel %vm288, %v543, %v545
      %v550 = vsel %vm288, %v545, %v543
      %551 = vrot.lane.b32.xlu0 %v492, 1
      %v552 = vpop.permute.xlu0 %551
      %554 = vrot.lane.b32.xlu0 %v491, 1
      %v555 = vpop.permute.xlu0 %554
      %v556 = vsel %vm299, %v555, %v552
      %v559 = vsel %vm299, %v552, %v555
      %v560 = vsel %vm307, %v546, %v559
      %v561 = vsel %vm308, %v550, %v556
      %v562 = vsel %vm314, %v559, %v546
      %v563 = vsel %vm315, %v556, %v550
      %566 = vrot.lane.b32.xlu0 %v516, 127
      %v567 = vpop.permute.xlu0 %566
      %568 = vrot.lane.b32.xlu0 %v517, 127
      %v569 = vpop.permute.xlu0 %568
      %v570 = vsel %vm288, %v567, %v569
      %v574 = vsel %vm288, %v569, %v567
      %575 = vrot.lane.b32.xlu0 %v517, 1
      %v576 = vpop.permute.xlu0 %575
      %578 = vrot.lane.b32.xlu0 %v516, 1
      %v579 = vpop.permute.xlu0 %578
      %v580 = vsel %vm299, %v579, %v576
      %v583 = vsel %vm299, %v576, %v579
      %v584 = vsel %vm307, %v570, %v583
      %v585 = vsel %vm308, %v574, %v580
      %v586 = vsel %vm314, %v583, %v570
      %v587 = vsel %vm315, %v580, %v574
      %v588 = vrot.slane %v514, 4
      %v589 = vrot.slane %v515, 4
      %v594 = vrot.slane %v560, 4
      %v595 = vrot.slane %v561, 4
      %v600 = vrot.slane %v562, 4
      %v601 = vrot.slane %v563, 4
      %v604 = vrot.slane %v516, 4
      %v605 = vrot.slane %v517, 4
      %v608 = vsel %vm403, %v538, %v588
      %v609 = vsel %vm403, %v539, %v589
      %v610 = vsel %vm403, %v540, %v594
      %v611 = vsel %vm403, %v541, %v595
      %v612 = vsel %vm403, %v491, %v600
      %v613 = vsel %vm403, %v492, %v601
      %v614 = vsel %vm403, %v584, %v604
      %v615 = vsel %vm403, %v585, %v605
      %v617 = vsel %vm412, %v493, 0
      %v620 = vsel %vm403, %v586, 0
      %v623 = vsel %vm403, %v587, 0
      %625 = vmatpush.msra.mxu0 0.0
      %626 = vmatpush.msra.mxu0 0.0
      %627 = vmatpush.msra.mxu0 0.0
      %628 = vmatpush.msra.mxu0 0.0
      %629 = vmatpush.msra.mxu0 0.0
      %630 = vmatpush.msra.mxu0 0.0
      %631 = vmatpush.msra.mxu0 0.0
      %632 = vmatpush.msra.mxu0 0.0
      %633 = vmatpush.msra.mxu0 0.0
      %634 = vmatpush.msra.mxu0 0.0
      %635 = vmatpush.msra.mxu0 0.0
      %636 = vmatpush.msra.mxu0 %v620
      %637 = vmatpush.msra.mxu0 %v614
      %638 = vmatpush.msra.mxu0 %v612
      %639 = vmatpush.msra.mxu0 %v610
      %640 = vmatpush.msra.mxu0 %v608
      %641 = vmatmul.f32.gmra.mxu0 %v617
      %v642 = vpop.f32.mrf.mxu0
      %v643 = vadd.f32 0.0, %v642
      %644 = vdwg.mxu0
      %645 = vmatpush.msra.mxu0 0.0
      %646 = vmatpush.msra.mxu0 0.0
      %647 = vmatpush.msra.mxu0 0.0
      %648 = vmatpush.msra.mxu0 0.0
      %649 = vmatpush.msra.mxu0 0.0
      %650 = vmatpush.msra.mxu0 0.0
      %651 = vmatpush.msra.mxu0 0.0
      %652 = vmatpush.msra.mxu0 0.0
      %653 = vmatpush.msra.mxu0 0.0
      %654 = vmatpush.msra.mxu0 0.0
      %655 = vmatpush.msra.mxu0 0.0
      %656 = vmatpush.msra.mxu0 %v623
      %657 = vmatpush.msra.mxu0 %v615
      %658 = vmatpush.msra.mxu0 %v613
      %659 = vmatpush.msra.mxu0 %v611
      %660 = vmatpush.msra.mxu0 %v609
      %661 = vmatmul.f32.gmra.mxu0 %v617
      %v662 = vpop.f32.mrf.mxu0
      %v663 = vadd.f32 0.0, %v662
      %664 = vdwg.mxu0
      %v665 = vsel %vm403, %v643, 0.0
      %v666 = vsel %vm403, %v663, 0.0
      %v667 = vadd.f32 %v665, %v666
      %668 = vadd.xlane.f32.xlu0 %v667
      %v669 = vpop.xlane.xlu0 %668
      %v670 = vmul.f32 %v669, 0.00390625
      %v671 = vsub.f32 %v643, %v670
      %v672 = vsub.f32 %v663, %v670
      %v673 = vmul.f32 %v671, %v671
      %v674 = vmul.f32 %v672, %v672
      %v675 = vsel %vm403, %v673, 0.0
      %v676 = vsel %vm403, %v674, 0.0
      %v677 = vadd.f32 %v675, %v676
      %678 = vadd.xlane.f32.xlu0 %v677
      %v679 = vpop.xlane.xlu0 %678
      %v680 = vmul.f32 %v679, 0.00390625
      %v681 = vadd.f32 %v680, 1e-05
      %v682 = vrsqrt.pop %v681
      %v683 = vmul.f32 %v682, %v681
      %v684 = vmul.f32 %v683, %v682
      %v685 = vmul.f32 0.5, %v684
      %v686 = vsub.f32 1.5, %v685
      %v687 = vmul.f32 %v682, %v686
      %vm688 = vweird.f32 %v681
      %vm689 = vweird.f32 %v682
      %vm690 = vmor %vm688, %vm689
      %v691 = vsel %vm690, %v682, %v687
      %v692 = vmul.f32 %v671, %v691
      %v693 = vmul.f32 %v672, %v691
      %v696 = vrot.slane %v693, 4
      %v697 = vsel %vm403, %v692, %v696
      %v699 = vadd.f32 %v231, %v697
      %700 = vst [vmem:[%s224] sm:$0xff] %v699
      %p701 = scmp.lt.s32.totalorder %s16, 1
      %s702 = scalar_select %p701, %s16, 1
      %s703 = smul.addr %s702, 2
      %s704 = smul.addr %s703, 4
      %s705 = scalar_lea.vmem %s5, %s704
      // Predicated region
      $region41: #{residual_block_forward.1} parent=39 // pred_check
        %p706 = pneg %p144
      $region42: #{residual_block_forward.1} parent=39 // pred_check_branch
        %708 = sbr.rel (%p706) target = $region44
      $region43: #{residual_block_forward.1} parent=39 // pred_region
        _
      $region44: #{residual_block_forward.1} parent=39 // pred_fallthru
        _
    $region40: #{residual_block_forward.1} parent=5 // pred_fallthru
      _
    %p709 = scmp.le.s32.totalorder 2, %s11
    // Predicated region
    $region45: #{residual_block_forward.1} parent=5 // pred_check
      %p710 = pneg %p709
    $region46: #{residual_block_forward.1} parent=5 // pred_check_branch
      %712 = sbr.rel (%p710) target = $region48
    $region47: #{residual_block_forward.1} parent=5 // pred_region
      %s713 = ssub.s32 %s11, 2
      // Predicated region
      $region49: #{residual_block_forward.1} parent=47 // pred_check
        %p714 = pneg %p150
      $region50: #{residual_block_forward.1} parent=47 // pred_check_branch
        %716 = sbr.rel (%p714) target = $region52
      $region51: #{residual_block_forward.1} parent=47 // pred_region
        %p717 = scmp.lt.s32.totalorder %s17, 1
        %s718 = scalar_select %p717, %s17, 1
        %s719 = smul.addr %s718, 2
        %s720 = smul.addr %s719, 4
        %s721 = scalar_lea.vmem %s5, %s720
      $region52: #{residual_block_forward.1} parent=47 // pred_fallthru
        _
    $region48: #{residual_block_forward.1} parent=5 // pred_fallthru
      _
  $region6: #{residual_block_forward.1} parent=0 // loop_footer
    %s15 = sadd.s32 1, %s11
  $region7: #{residual_block_forward.1} parent=0 // loop_footer_branch
    %10 = sbr.rel target = $region3
  $region8: #{residual_block_forward.1} parent=0 // loop_exit
    _

</llo_original>
